<compile_context>
chip_gen: v7x
topology: tpu7x:2x2x1
jax: 0.10.0
libtpu: 0.0.40
codegen_flags: <defaults>
</compile_context>

<pallas_src>
import math
import jax
import jax.numpy as jnp
from jax import lax
from jax.experimental import pallas as pl
from jax.experimental.pallas import tpu as pltpu


def _round_up(x, m):
    return ((x + m - 1) // m) * m


def _pad2(a, r, c):
    """Zero-pad a 2-D array to (r, c); no-op (no XLA pad) if already that shape."""
    pr, pc = r - a.shape[0], c - a.shape[1]
    if pr == 0 and pc == 0:
        return a
    return jnp.pad(a, ((0, pr), (0, pc)))


def _pad1(a, n):
    p = n - a.shape[0]
    if p == 0:
        return a
    return jnp.pad(a, (0, p))


# ---------------------------------------------------------------------------
# Kernels
# ---------------------------------------------------------------------------
def _noisy_linear_kernel(x_ref, wmu_ref, wsig_ref, eout_ref, ein_ref,
                         bmu_ref, bsig_ref, beps_ref, o_ref, acc_ref):
    """Training-mode fused kernel: y = x @ (Wmu + Wsig*(eps_out⊗eps_in))^T + b_eff."""
    k = pl.program_id(2)

    @pl.when(k == 0)
    def _():
        acc_ref[...] = jnp.zeros_like(acc_ref)

    # Factorized noise recomposed on-chip (VPU) — weight_epsilon never touches HBM.
    w_eff = wmu_ref[...] + wsig_ref[...] * (eout_ref[...] * ein_ref[...])   # (tn, tk)

    # Contract x (tm, tk) dim 1 against w_eff (tn, tk) dim 1 -> (tm, tn); no .T.
    acc_ref[...] += lax.dot_general(
        x_ref[...], w_eff,
        dimension_numbers=(((1,), (1,)), ((), ())),
        preferred_element_type=jnp.float32)

    @pl.when(k == pl.num_programs(2) - 1)
    def _():
        b_eff = bmu_ref[...] + bsig_ref[...] * beps_ref[...]                # (1, tn)
        o_ref[...] = (acc_ref[...] + b_eff).astype(o_ref.dtype)


def _mu_linear_kernel(x_ref, wmu_ref, bmu_ref, o_ref, acc_ref):
    """Eval-mode kernel: plain y = x @ Wmu^T + b_mu (no noise arrays streamed)."""
    k = pl.program_id(2)

    @pl.when(k == 0)
    def _():
        acc_ref[...] = jnp.zeros_like(acc_ref)

    acc_ref[...] += lax.dot_general(
        x_ref[...], wmu_ref[...],
        dimension_numbers=(((1,), (1,)), ((), ())),
        preferred_element_type=jnp.float32)

    @pl.when(k == pl.num_programs(2) - 1)
    def _():
        o_ref[...] = (acc_ref[...] + bmu_ref[...]).astype(o_ref.dtype)


# ---------------------------------------------------------------------------
# Wrapper
# ---------------------------------------------------------------------------
def noisy_linear(x, weight_mu, weight_sigma, eps_in, eps_out,
                 bias_mu, bias_sigma, bias_epsilon, *,
                 training=True, tm=128, tn=256, tk=512):
    """Pallas implementation of NoisyLinear.forward."""
    B, in_f = x.shape
    out_f, _ = weight_mu.shape
    dtype = x.dtype

    # Clamp tiles for small problems (sublane multiple of 8, lane multiple of 128).
    tm = min(tm, _round_up(B, 8))
    tn = min(tn, _round_up(out_f, 128))
    tk = min(tk, _round_up(in_f, 128))

    Bp = _round_up(B, tm)
    Np = _round_up(out_f, tn)
    Kp = _round_up(in_f, tk)

    # Zero-pad to tile multiples (zero rows/cols contribute nothing to the sum).
    xp = _pad2(x, Bp, Kp)
    wmu = _pad2(weight_mu, Np, Kp)
    bmu = _pad1(bias_mu, Np).reshape(1, Np)

    grid = (Bp // tm, Np // tn, Kp // tk)

    x_spec = pl.BlockSpec((tm, tk), lambda i, j, k: (i, k))
    w_spec = pl.BlockSpec((tn, tk), lambda i, j, k: (j, k))
    b_spec = pl.BlockSpec((1, tn), lambda i, j, k: (0, j))     # k-invariant -> no re-DMA
    o_spec = pl.BlockSpec((tm, tn), lambda i, j, k: (i, j))

    # Explicit VMEM budget: double-buffered inputs + output + f32 accumulator,
    # with 2x headroom, capped below v7x's 64 MiB physical VMEM.
    elt = jnp.dtype(dtype).itemsize
    vmem_est = 2 * elt * (tm * tk + 2 * tn * tk + tk + 4 * tn + tm * tn) + 4 * tm * tn
    vmem_limit = int(min(48 * 1024 * 1024, max(2 * vmem_est, 16 * 1024 * 1024)))

    cparams = pltpu.CompilerParams(
        dimension_semantics=("parallel", "parallel", "arbitrary"),
        vmem_limit_bytes=vmem_limit)

    n_weight_arrays = 2 if training else 1
    cost = pl.CostEstimate(
        flops=2 * B * in_f * out_f,
        transcendentals=0,
        bytes_accessed=elt * (B * in_f + n_weight_arrays * out_f * in_f
                              + B * out_f + 4 * out_f + in_f))

    if training:
        wsig = _pad2(weight_sigma, Np, Kp)
        ein = _pad1(eps_in, Kp).reshape(1, Kp)
        eout = _pad1(eps_out, Np).reshape(Np, 1)
        bsig = _pad1(bias_sigma, Np).reshape(1, Np)
        beps = _pad1(bias_epsilon, Np).reshape(1, Np)

        ein_spec = pl.BlockSpec((1, tk), lambda i, j, k: (0, k))
        eout_spec = pl.BlockSpec((tn, 1), lambda i, j, k: (j, 0))  # k-invariant

        out = pl.pallas_call(
            _noisy_linear_kernel,
            out_shape=jax.ShapeDtypeStruct((Bp, Np), dtype),
            grid_spec=pltpu.PrefetchScalarGridSpec(
                num_scalar_prefetch=0,
                grid=grid,
                in_specs=[x_spec, w_spec, w_spec, eout_spec, ein_spec,
                          b_spec, b_spec, b_spec],
                out_specs=o_spec,
                scratch_shapes=[pltpu.VMEM((tm, tn), jnp.float32)]),
            compiler_params=cparams,
            cost_estimate=cost,
        )(xp, wmu, wsig, eout, ein, bmu, bsig, beps)
    else:
        out = pl.pallas_call(
            _mu_linear_kernel,
            out_shape=jax.ShapeDtypeStruct((Bp, Np), dtype),
            grid_spec=pltpu.PrefetchScalarGridSpec(
                num_scalar_prefetch=0,
                grid=grid,
                in_specs=[x_spec, w_spec, b_spec],
                out_specs=o_spec,
                scratch_shapes=[pltpu.VMEM((tm, tn), jnp.float32)]),
            compiler_params=cparams,
            cost_estimate=cost,
        )(xp, wmu, bmu)

    if Bp == B and Np == out_f:
        return out
    return out[:B, :out_f]


# ---------------------------------------------------------------------------
# Parameter / noise init mirroring NoisyLinear.__init__ (factorized noise kept
# as the two 1-D vectors; the outer product lives only inside the kernel).
# ---------------------------------------------------------------------------
def init_noisy_linear_params(key, in_features, out_features, sigma_init=0.017):
    k_wmu, k_bmu, k_ein, k_eout = jax.random.split(key, 4)
    mu_range = 1.0 / math.sqrt(in_features)

    weight_mu = jax.random.uniform(
        k_wmu, (out_features, in_features), jnp.float32, -mu_range, mu_range)
    weight_sigma = jnp.full((out_features, in_features), sigma_init, jnp.float32)
    bias_mu = jax.random.uniform(
        k_bmu, (out_features,), jnp.float32, -mu_range, mu_range)
    bias_sigma = jnp.full((out_features,), sigma_init, jnp.float32)

    def scale_noise(k, size):
        v = jax.random.normal(k, (size,), jnp.float32)
        return jnp.sign(v) * jnp.sqrt(jnp.abs(v))

    eps_in = scale_noise(k_ein, in_features)
    eps_out = scale_noise(k_eout, out_features)
    bias_epsilon = eps_out            # same as the PyTorch buffer

    return (weight_mu, weight_sigma, eps_in, eps_out,
            bias_mu, bias_sigma, bias_epsilon)


if __name__ == "__main__":
    key = jax.random.PRNGKey(0)
    k_params, k_x = jax.random.split(key)

    # Small but tile-exercising shapes: N padding (120 -> 128) + 2-step K reduction.
    B, in_features, out_features = 16, 256, 120
    params = init_noisy_linear_params(k_params, in_features, out_features)
    (weight_mu, weight_sigma, eps_in, eps_out,
     bias_mu, bias_sigma, bias_epsilon) = params

    x = jax.random.normal(k_x, (B, in_features), jnp.float32)

    # Training-mode (noisy) forward, tk=128 -> 2 reduction steps through the grid.
    out_train = noisy_linear(x, *params, training=True, tm=16, tn=128, tk=128)
    out_train = jax.block_until_ready(out_train)

    # Eval-mode (mu-only) forward.
    out_eval = noisy_linear(x, *params, training=False, tm=16, tn=128, tk=128)
    out_eval = jax.block_until_ready(out_eval)

    # Pure-JAX references.
    w_eff = weight_mu + weight_sigma * (eps_out[:, None] * eps_in[None, :])
    b_eff = bias_mu + bias_sigma * bias_epsilon
    ref_train = x @ w_eff.T + b_eff
    ref_eval = x @ weight_mu.T + bias_mu

    assert out_train.shape == (B, out_features)
    assert out_eval.shape == (B, out_features)
    assert jnp.allclose(out_train, ref_train, atol=1e-5, rtol=1e-5), "train mismatch"
    assert jnp.allclose(out_eval, ref_eval, atol=1e-5, rtol=1e-5), "eval mismatch"

    print("KERNEL_OK")
</pallas_src>

<mosaic_0001>
module attributes {stable_mosaic.version = 11 : i64} {
  func.func @_noisy_linear_kernel(%arg0: i32, %arg1: i32, %arg2: i32, %arg3: memref<16x128xf32, #tpu.memory_space<vmem>>, %arg4: memref<128x128xf32, #tpu.memory_space<vmem>>, %arg5: memref<128x128xf32, #tpu.memory_space<vmem>>, %arg6: memref<128x1xf32, #tpu.memory_space<vmem>>, %arg7: memref<1x128xf32, #tpu.memory_space<vmem>>, %arg8: memref<1x128xf32, #tpu.memory_space<vmem>>, %arg9: memref<1x128xf32, #tpu.memory_space<vmem>>, %arg10: memref<1x128xf32, #tpu.memory_space<vmem>>, %arg11: memref<16x128xf32, #tpu.memory_space<vmem>>, %arg12: memref<16x128xf32, #tpu.memory_space<vmem>>) attributes {dimension_semantics = [#tpu.dimension_semantics<parallel>, #tpu.dimension_semantics<parallel>, #tpu.dimension_semantics<arbitrary>], iteration_bounds = array<i64: 1, 1, 2>, scalar_prefetch = 0 : i64, scratch_operands = 1 : i64, tpu.core_type = #tpu.core_type<tc>, window_params = [{transform_indices = @transform_0, window_bounds = array<i64: 16, 128>}, {transform_indices = @transform_1, window_bounds = array<i64: 128, 128>}, {transform_indices = @transform_2, window_bounds = array<i64: 128, 128>}, {transform_indices = @transform_3, window_bounds = array<i64: 128, 1>}, {transform_indices = @transform_4, window_bounds = array<i64: 1, 128>}, {transform_indices = @transform_5, window_bounds = array<i64: 1, 128>}, {transform_indices = @transform_6, window_bounds = array<i64: 1, 128>}, {transform_indices = @transform_7, window_bounds = array<i64: 1, 128>}, {transform_indices = @transform_8, window_bounds = array<i64: 16, 128>}]} {
    %c0_i32 = arith.constant 0 : i32
    %0 = arith.cmpi eq, %arg2, %c0_i32 : i32
    %1 = arith.extui %0 : i1 to i32
    %c0_i32_0 = arith.constant 0 : i32
    %2 = arith.cmpi ne, %1, %c0_i32_0 : i32
    scf.if %2 {
      %cst_15 = arith.constant 0.000000e+00 : f32
      %20 = vector.broadcast %cst_15 : f32 to vector<16x128xf32>
      %c0_16 = arith.constant 0 : index
      %c0_17 = arith.constant 0 : index
      %21 = vector.load %arg12[%c0_16, %c0_17] : memref<16x128xf32, #tpu.memory_space<vmem>>, vector<16x128xf32>
      tpu.vector_store %arg12[%c0_16, %c0_17], %20 {strides = array<i32>} : memref<16x128xf32, #tpu.memory_space<vmem>>, vector<16x128xf32>,
    } else {
    }
    %c0 = arith.constant 0 : index
    %c0_1 = arith.constant 0 : index
    %3 = vector.load %arg4[%c0, %c0_1] : memref<128x128xf32, #tpu.memory_space<vmem>>, vector<128x128xf32>
    %c0_2 = arith.constant 0 : index
    %c0_3 = arith.constant 0 : index
    %4 = vector.load %arg5[%c0_2, %c0_3] : memref<128x128xf32, #tpu.memory_space<vmem>>, vector<128x128xf32>
    %c0_4 = arith.constant 0 : index
    %c0_5 = arith.constant 0 : index
    %5 = vector.load %arg6[%c0_4, %c0_5] : memref<128x1xf32, #tpu.memory_space<vmem>>, vector<128x1xf32>
    %c0_6 = arith.constant 0 : index
    %c0_7 = arith.constant 0 : index
    %6 = vector.load %arg7[%c0_6, %c0_7] : memref<1x128xf32, #tpu.memory_space<vmem>>, vector<1x128xf32>
    %7 = vector.broadcast %5 : vector<128x1xf32> to vector<128x128xf32>
    %8 = vector.broadcast %6 : vector<1x128xf32> to vector<128x128xf32>
    %9 = arith.mulf %7, %8 : vector<128x128xf32>
    %10 = arith.mulf %4, %9 : vector<128x128xf32>
    %11 = arith.addf %3, %10 : vector<128x128xf32>
    %c0_8 = arith.constant 0 : index
    %c0_9 = arith.constant 0 : index
    %12 = vector.load %arg12[%c0_8, %c0_9] : memref<16x128xf32, #tpu.memory_space<vmem>>, vector<16x128xf32>
    %c0_10 = arith.constant 0 : index
    %c0_11 = arith.constant 0 : index
    %13 = vector.load %arg3[%c0_10, %c0_11] : memref<16x128xf32, #tpu.memory_space<vmem>>, vector<16x128xf32>
    %cst = arith.constant dense<0.000000e+00> : vector<16x128xf32>
    %14 = tpu.matmul %13, %11, %cst {dimension_numbers = #tpu.dot_dimension_numbers<[1], [1], [0], [0], [0, 0, 1, 0], [], []>} : vector<16x128xf32>, vector<128x128xf32>, vector<16x128xf32> -> vector<16x128xf32>
    %15 = arith.addf %12, %14 : vector<16x128xf32>
    %c0_12 = arith.constant 0 : index
    %c0_13 = arith.constant 0 : index
    %16 = vector.load %arg12[%c0_12, %c0_13] : memref<16x128xf32, #tpu.memory_space<vmem>>, vector<16x128xf32>
    tpu.vector_store %arg12[%c0_12, %c0_13], %15 {strides = array<i32>} : memref<16x128xf32, #tpu.memory_space<vmem>>, vector<16x128xf32>,
    %c1_i32 = arith.constant 1 : i32
    %17 = arith.cmpi eq, %arg2, %c1_i32 : i32
    %18 = arith.extui %17 : i1 to i32
    %c0_i32_14 = arith.constant 0 : i32
    %19 = arith.cmpi ne, %18, %c0_i32_14 : i32
    scf.if %19 {
      %c0_15 = arith.constant 0 : index
      %c0_16 = arith.constant 0 : index
      %20 = vector.load %arg8[%c0_15, %c0_16] : memref<1x128xf32, #tpu.memory_space<vmem>>, vector<1x128xf32>
      %c0_17 = arith.constant 0 : index
      %c0_18 = arith.constant 0 : index
      %21 = vector.load %arg9[%c0_17, %c0_18] : memref<1x128xf32, #tpu.memory_space<vmem>>, vector<1x128xf32>
      %c0_19 = arith.constant 0 : index
      %c0_20 = arith.constant 0 : index
      %22 = vector.load %arg10[%c0_19, %c0_20] : memref<1x128xf32, #tpu.memory_space<vmem>>, vector<1x128xf32>
      %23 = arith.mulf %21, %22 : vector<1x128xf32>
      %24 = arith.addf %20, %23 : vector<1x128xf32>
      %c0_21 = arith.constant 0 : index
      %c0_22 = arith.constant 0 : index
      %25 = vector.load %arg12[%c0_21, %c0_22] : memref<16x128xf32, #tpu.memory_space<vmem>>, vector<16x128xf32>
      %26 = vector.broadcast %24 : vector<1x128xf32> to vector<16x128xf32>
      %27 = arith.addf %25, %26 : vector<16x128xf32>
      %c0_23 = arith.constant 0 : index
      %c0_24 = arith.constant 0 : index
      %28 = vector.load %arg11[%c0_23, %c0_24] : memref<16x128xf32, #tpu.memory_space<vmem>>, vector<16x128xf32>
      tpu.vector_store %arg11[%c0_23, %c0_24], %27 {strides = array<i32>} : memref<16x128xf32, #tpu.memory_space<vmem>>, vector<16x128xf32>,
    } else {
    }
    return
  }
  func.func @transform_0(%arg0: i32, %arg1: i32, %arg2: i32) -> (i32, i32) {
    %c0_i32 = arith.constant 0 : i32
    return %arg0, %arg2 : i32, i32
  }
  func.func @transform_1(%arg0: i32, %arg1: i32, %arg2: i32) -> (i32, i32) {
    %c0_i32 = arith.constant 0 : i32
    return %arg1, %arg2 : i32, i32
  }
  func.func @transform_2(%arg0: i32, %arg1: i32, %arg2: i32) -> (i32, i32) {
    %c0_i32 = arith.constant 0 : i32
    return %arg1, %arg2 : i32, i32
  }
  func.func @transform_3(%arg0: i32, %arg1: i32, %arg2: i32) -> (i32, i32) {
    %c0_i32 = arith.constant 0 : i32
    %c0_i32_0 = arith.constant 0 : i32
    return %arg1, %c0_i32 : i32, i32
  }
  func.func @transform_4(%arg0: i32, %arg1: i32, %arg2: i32) -> (i32, i32) {
    %c0_i32 = arith.constant 0 : i32
    %c0_i32_0 = arith.constant 0 : i32
    return %c0_i32, %arg2 : i32, i32
  }
  func.func @transform_5(%arg0: i32, %arg1: i32, %arg2: i32) -> (i32, i32) {
    %c0_i32 = arith.constant 0 : i32
    %c0_i32_0 = arith.constant 0 : i32
    return %c0_i32, %arg1 : i32, i32
  }
  func.func @transform_6(%arg0: i32, %arg1: i32, %arg2: i32) -> (i32, i32) {
    %c0_i32 = arith.constant 0 : i32
    %c0_i32_0 = arith.constant 0 : i32
    return %c0_i32, %arg1 : i32, i32
  }
  func.func @transform_7(%arg0: i32, %arg1: i32, %arg2: i32) -> (i32, i32) {
    %c0_i32 = arith.constant 0 : i32
    %c0_i32_0 = arith.constant 0 : i32
    return %c0_i32, %arg1 : i32, i32
  }
  func.func @transform_8(%arg0: i32, %arg1: i32, %arg2: i32) -> (i32, i32) {
    %c0_i32 = arith.constant 0 : i32
    return %arg0, %arg1 : i32, i32
  }
}

</mosaic_0001>

<llo_original>
// kernel: tpu_custom_call.1
$region0: #{tpu_custom_call.1}
  #allocation0 [shape = 'u32[]', space=smem, size = 0x4, offset = 0x4, fixed_abs, tag = 'smem constant byte address 0x4 - core index']
  #allocation1 [shape = 'u32[144,128]{1,0:T(1,128)}', space=vmem, size = 0x12000, scoped, tag = 'internal scratch']
  #allocation2 [shape = 'f32[16,128]{1,0:T(8,128)}', space=vmem, size = 0x2000, scoped, tag = 'scratch operand']
  %s0 = inlined_call_operand.vmem [shape: f32[16,256], index: 0, kind: input, shape index: {}]
  %s1 = inlined_call_operand.hbm [shape: f32[128,256], index: 1, kind: input, shape index: {}]
  %s2 = inlined_call_operand.hbm [shape: f32[128,256], index: 2, kind: input, shape index: {}]
  %s3 = inlined_call_operand.vmem [shape: f32[128,1], index: 3, kind: input, shape index: {}]
  %s4 = inlined_call_operand.vmem [shape: f32[1,256], index: 4, kind: input, shape index: {}]
  %s5 = inlined_call_operand.vmem [shape: f32[1,128], index: 5, kind: input, shape index: {}]
  %s6 = inlined_call_operand.vmem [shape: f32[1,128], index: 6, kind: input, shape index: {}]
  %s7 = inlined_call_operand.vmem [shape: f32[1,128], index: 7, kind: input, shape index: {}]
  %s8 = inlined_call_operand.hbm [shape: f32[16,128], index: 8, kind: output, shape index: {}]
  %s9 = sld [smem:[#allocation0]]
  $region119: #{tpu_custom_call.1} parent=0
    _
  %s11 = ssub.s32 1, %s9
  %s12 = scalar_select 0, %s11, %s9
  $region1: #{tpu_custom_call.1} parent=0
    #allocation3 [shape = 'u8[16384]{0}', space=vmem, size = 0x4000, scoped, tag = 'input window, operand 0']
    #allocation4 [shape = 'u8[131072]{0}', space=vmem, size = 0x20000, scoped, tag = 'input window, operand 1']
    #allocation5 [shape = 's32[2]{0}', space=sflag, size = 0x8, scoped, tag = 'scoped memory for tpu_custom_call.1']
    #allocation6 [shape = 's32[2]{0}', space=sflag, size = 0x8, scoped, tag = 'scoped memory for tpu_custom_call.1']
    #allocation7 [shape = 'u8[131072]{0}', space=vmem, size = 0x20000, scoped, tag = 'input window, operand 2']
    #allocation8 [shape = 's32[2]{0}', space=sflag, size = 0x8, scoped, tag = 'scoped memory for tpu_custom_call.1']
    #allocation9 [shape = 'u8[8192]{0}', space=vmem, size = 0x2000, scoped, tag = 'output window, operand 0, single buffered']
    %13 = vsyncpa [#allocation5], 0
    %s14 = scalar_lea.sflag [#allocation5], 1
    %15 = vsyncpa %s14, 0
    %16 = vsyncpa [#allocation8], 0
    %s17 = scalar_lea.sflag [#allocation8], 1
    %18 = vsyncpa %s17, 0
    %19 = vsyncpa [#allocation6], 0
    loop: start=0, step=1, limit=4
    $region2: #{tpu_custom_call.1} parent=1 // loop_pre_header
      _
    $region3: #{tpu_custom_call.1} parent=1 // loop_header
      %s21 = sphi 0, %s25
      %p22 = scmp.ge.s32.totalorder %s21, 4
      %s28 = sphi 0, %s47
      %s29 = sphi 0, %s43
      %s30 = sphi 0, %s39
      %s31 = sphi 0, %s28
      %s32 = sphi 0, %s29
      %s33 = sphi 0, %s30
      %s34 = sphi 0, %s31
      %s35 = sphi 0, %s32
      %s36 = sphi 0, %s33
      %s52 = sphi 0, %s54
      %s55 = sphi 0, %s52
      %s56 = sphi 0, %s55
      %s72 = sphi 0, %s56
      %s80 = sphi 0, %s82
      %s83 = sphi 0, %s80
      %s84 = sphi 0, %s83
      %s100 = sphi 0, %s84
      %s108 = sphi 0, %s110
      %s111 = sphi 0, %s108
      %s112 = sphi 0, %s111
      %s128 = sphi 0, %s112
      %s134 = sphi 0, %s136
      %s137 = sphi 0, %s134
      %s138 = sphi 0, %s137
      %s154 = sphi 0, %s138
      %s160 = sphi 0, %s162
      %s163 = sphi 0, %s160
      %s164 = sphi 0, %s163
      %s180 = sphi 0, %s164
      %s186 = sphi 0, %s188
      %s189 = sphi 0, %s186
      %s190 = sphi 0, %s189
      %s206 = sphi 0, %s190
      %s212 = sphi 0, %s214
      %s215 = sphi 0, %s212
      %s216 = sphi 0, %s215
      %s232 = sphi 0, %s216
      %s238 = sphi 0, %s240
      %s241 = sphi 0, %s238
      %s242 = sphi 0, %s241
      %s258 = sphi 0, %s242
      %s266 = sphi 0, %s268
      %s269 = sphi 0, %s266
      %s270 = sphi 0, %s269
      %s286 = sphi 0, %s270
    $region4: #{tpu_custom_call.1} parent=1 // loop_header_branch
      %24 = sbr.rel (%p22) target = $region8
    $region5: #{tpu_custom_call.1} parent=1 // loop_body
      %s26 = ssub.s32 %s21, 1
      %s27 = ssub.s32 %s21, 2
      %s37 = sadd.s32 1, %s30
      %p38 = scmp.ge.s32.totalorder %s37, 2
      %s39 = scalar_select %p38, 0, %s37
      %s40 = sadd.s32 1, %s29
      %s41 = scalar_select %p38, %s40, %s29
      %p42 = scmp.ge.s32.totalorder %s41, 1
      %s43 = scalar_select %p42, 0, %s41
      %s44 = sadd.s32 1, %s28
      %s45 = scalar_select %p42, %s44, %s28
      %p46 = scmp.ge.s32.totalorder %s45, 1
      %s47 = scalar_select %p46, 0, %s45
      %s48 = ssub.s32 %s28, %s47
      %s49 = ssub.s32 %s30, %s39
      %s50 = sor.u32 %s48, %s49
      %p51 = scmp.eq.s32.totalorder %s50, 0
      %s53 = sadd.s32 %s52, 1
      %s54 = scalar_select %p51, %s52, %s53
      %p57 = pneg %p51
      %p58 = scmp.eq.s32.totalorder %s21, 1
      %p59 = por %p57, %p58
      %p60 = scmp.ne.s32.totalorder %s52, %s55
      %p61 = scmp.eq.s32.totalorder %s21, 0
      %p62 = por %p60, %p61
      %p63 = scmp.ne.s32.totalorder %s52, %s55
      %p64 = scmp.eq.s32.totalorder %s26, 1
      %p65 = por %p63, %p64
      %p66 = scmp.ne.s32.totalorder %s55, %s56
      %p67 = scmp.eq.s32.totalorder %s26, 0
      %p68 = por %p66, %p67
      %p69 = scmp.ne.s32.totalorder %s55, %s56
      %p70 = scmp.eq.s32.totalorder %s27, 1
      %p71 = por %p69, %p70
      %p73 = scmp.ne.s32.totalorder %s56, %s72
      %p74 = scmp.eq.s32.totalorder %s27, 0
      %p75 = por %p73, %p74
      %s76 = ssub.s32 %s29, %s43
      %s77 = ssub.s32 %s30, %s39
      %s78 = sor.u32 %s76, %s77
      %p79 = scmp.eq.s32.totalorder %s78, 0
      %s81 = sadd.s32 %s80, 1
      %s82 = scalar_select %p79, %s80, %s81
      %p85 = pneg %p79
      %p86 = scmp.eq.s32.totalorder %s21, 1
      %p87 = por %p85, %p86
      %p88 = scmp.ne.s32.totalorder %s80, %s83
      %p89 = scmp.eq.s32.totalorder %s21, 0
      %p90 = por %p88, %p89
      %p91 = scmp.ne.s32.totalorder %s80, %s83
      %p92 = scmp.eq.s32.totalorder %s26, 1
      %p93 = por %p91, %p92
      %p94 = scmp.ne.s32.totalorder %s83, %s84
      %p95 = scmp.eq.s32.totalorder %s26, 0
      %p96 = por %p94, %p95
      %p97 = scmp.ne.s32.totalorder %s83, %s84
      %p98 = scmp.eq.s32.totalorder %s27, 1
      %p99 = por %p97, %p98
      %p101 = scmp.ne.s32.totalorder %s84, %s100
      %p102 = scmp.eq.s32.totalorder %s27, 0
      %p103 = por %p101, %p102
      %s104 = ssub.s32 %s29, %s43
      %s105 = ssub.s32 %s30, %s39
      %s106 = sor.u32 %s104, %s105
      %p107 = scmp.eq.s32.totalorder %s106, 0
      %s109 = sadd.s32 %s108, 1
      %s110 = scalar_select %p107, %s108, %s109
      %p113 = pneg %p107
      %p114 = scmp.eq.s32.totalorder %s21, 1
      %p115 = por %p113, %p114
      %p116 = scmp.ne.s32.totalorder %s108, %s111
      %p117 = scmp.eq.s32.totalorder %s21, 0
      %p118 = por %p116, %p117
      %p119 = scmp.ne.s32.totalorder %s108, %s111
      %p120 = scmp.eq.s32.totalorder %s26, 1
      %p121 = por %p119, %p120
      %p122 = scmp.ne.s32.totalorder %s111, %s112
      %p123 = scmp.eq.s32.totalorder %s26, 0
      %p124 = por %p122, %p123
      %p125 = scmp.ne.s32.totalorder %s111, %s112
      %p126 = scmp.eq.s32.totalorder %s27, 1
      %p127 = por %p125, %p126
      %p129 = scmp.ne.s32.totalorder %s112, %s128
      %p130 = scmp.eq.s32.totalorder %s27, 0
      %p131 = por %p129, %p130
      %s132 = ssub.s32 %s29, %s43
      %p133 = scmp.eq.s32.totalorder %s132, 0
      %s135 = sadd.s32 %s134, 1
      %s136 = scalar_select %p133, %s134, %s135
      %p139 = pneg %p133
      %p140 = scmp.eq.s32.totalorder %s21, 1
      %p141 = por %p139, %p140
      %p142 = scmp.ne.s32.totalorder %s134, %s137
      %p143 = scmp.eq.s32.totalorder %s21, 0
      %p144 = por %p142, %p143
      %p145 = scmp.ne.s32.totalorder %s134, %s137
      %p146 = scmp.eq.s32.totalorder %s26, 1
      %p147 = por %p145, %p146
      %p148 = scmp.ne.s32.totalorder %s137, %s138
      %p149 = scmp.eq.s32.totalorder %s26, 0
      %p150 = por %p148, %p149
      %p151 = scmp.ne.s32.totalorder %s137, %s138
      %p152 = scmp.eq.s32.totalorder %s27, 1
      %p153 = por %p151, %p152
      %p155 = scmp.ne.s32.totalorder %s138, %s154
      %p156 = scmp.eq.s32.totalorder %s27, 0
      %p157 = por %p155, %p156
      %s158 = ssub.s32 %s30, %s39
      %p159 = scmp.eq.s32.totalorder %s158, 0
      %s161 = sadd.s32 %s160, 1
      %s162 = scalar_select %p159, %s160, %s161
      %p165 = pneg %p159
      %p166 = scmp.eq.s32.totalorder %s21, 1
      %p167 = por %p165, %p166
      %p168 = scmp.ne.s32.totalorder %s160, %s163
      %p169 = scmp.eq.s32.totalorder %s21, 0
      %p170 = por %p168, %p169
      %p171 = scmp.ne.s32.totalorder %s160, %s163
      %p172 = scmp.eq.s32.totalorder %s26, 1
      %p173 = por %p171, %p172
      %p174 = scmp.ne.s32.totalorder %s163, %s164
      %p175 = scmp.eq.s32.totalorder %s26, 0
      %p176 = por %p174, %p175
      %p177 = scmp.ne.s32.totalorder %s163, %s164
      %p178 = scmp.eq.s32.totalorder %s27, 1
      %p179 = por %p177, %p178
      %p181 = scmp.ne.s32.totalorder %s164, %s180
      %p182 = scmp.eq.s32.totalorder %s27, 0
      %p183 = por %p181, %p182
      %s184 = ssub.s32 %s29, %s43
      %p185 = scmp.eq.s32.totalorder %s184, 0
      %s187 = sadd.s32 %s186, 1
      %s188 = scalar_select %p185, %s186, %s187
      %p191 = pneg %p185
      %p192 = scmp.eq.s32.totalorder %s21, 1
      %p193 = por %p191, %p192
      %p194 = scmp.ne.s32.totalorder %s186, %s189
      %p195 = scmp.eq.s32.totalorder %s21, 0
      %p196 = por %p194, %p195
      %p197 = scmp.ne.s32.totalorder %s186, %s189
      %p198 = scmp.eq.s32.totalorder %s26, 1
      %p199 = por %p197, %p198
      %p200 = scmp.ne.s32.totalorder %s189, %s190
      %p201 = scmp.eq.s32.totalorder %s26, 0
      %p202 = por %p200, %p201
      %p203 = scmp.ne.s32.totalorder %s189, %s190
      %p204 = scmp.eq.s32.totalorder %s27, 1
      %p205 = por %p203, %p204
      %p207 = scmp.ne.s32.totalorder %s190, %s206
      %p208 = scmp.eq.s32.totalorder %s27, 0
      %p209 = por %p207, %p208
      %s210 = ssub.s32 %s29, %s43
      %p211 = scmp.eq.s32.totalorder %s210, 0
      %s213 = sadd.s32 %s212, 1
      %s214 = scalar_select %p211, %s212, %s213
      %p217 = pneg %p211
      %p218 = scmp.eq.s32.totalorder %s21, 1
      %p219 = por %p217, %p218
      %p220 = scmp.ne.s32.totalorder %s212, %s215
      %p221 = scmp.eq.s32.totalorder %s21, 0
      %p222 = por %p220, %p221
      %p223 = scmp.ne.s32.totalorder %s212, %s215
      %p224 = scmp.eq.s32.totalorder %s26, 1
      %p225 = por %p223, %p224
      %p226 = scmp.ne.s32.totalorder %s215, %s216
      %p227 = scmp.eq.s32.totalorder %s26, 0
      %p228 = por %p226, %p227
      %p229 = scmp.ne.s32.totalorder %s215, %s216
      %p230 = scmp.eq.s32.totalorder %s27, 1
      %p231 = por %p229, %p230
      %p233 = scmp.ne.s32.totalorder %s216, %s232
      %p234 = scmp.eq.s32.totalorder %s27, 0
      %p235 = por %p233, %p234
      %s236 = ssub.s32 %s29, %s43
      %p237 = scmp.eq.s32.totalorder %s236, 0
      %s239 = sadd.s32 %s238, 1
      %s240 = scalar_select %p237, %s238, %s239
      %p243 = pneg %p237
      %p244 = scmp.eq.s32.totalorder %s21, 1
      %p245 = por %p243, %p244
      %p246 = scmp.ne.s32.totalorder %s238, %s241
      %p247 = scmp.eq.s32.totalorder %s21, 0
      %p248 = por %p246, %p247
      %p249 = scmp.ne.s32.totalorder %s238, %s241
      %p250 = scmp.eq.s32.totalorder %s26, 1
      %p251 = por %p249, %p250
      %p252 = scmp.ne.s32.totalorder %s241, %s242
      %p253 = scmp.eq.s32.totalorder %s26, 0
      %p254 = por %p252, %p253
      %p255 = scmp.ne.s32.totalorder %s241, %s242
      %p256 = scmp.eq.s32.totalorder %s27, 1
      %p257 = por %p255, %p256
      %p259 = scmp.ne.s32.totalorder %s242, %s258
      %p260 = scmp.eq.s32.totalorder %s27, 0
      %p261 = por %p259, %p260
      %s262 = ssub.s32 %s28, %s47
      %s263 = ssub.s32 %s29, %s43
      %s264 = sor.u32 %s262, %s263
      %p265 = scmp.eq.s32.totalorder %s264, 0
      %s267 = sadd.s32 %s266, 1
      %s268 = scalar_select %p265, %s266, %s267
      %p271 = pneg %p265
      %p272 = scmp.eq.s32.totalorder %s21, 1
      %p273 = por %p271, %p272
      %p274 = scmp.ne.s32.totalorder %s266, %s269
      %p275 = scmp.eq.s32.totalorder %s21, 0
      %p276 = por %p274, %p275
      %p277 = scmp.ne.s32.totalorder %s266, %s269
      %p278 = scmp.eq.s32.totalorder %s26, 1
      %p279 = por %p277, %p278
      %p280 = scmp.ne.s32.totalorder %s269, %s270
      %p281 = scmp.eq.s32.totalorder %s26, 0
      %p282 = por %p280, %p281
      %p283 = scmp.ne.s32.totalorder %s269, %s270
      %p284 = scmp.eq.s32.totalorder %s27, 1
      %p285 = por %p283, %p284
      %p287 = scmp.ne.s32.totalorder %s270, %s286
      %p288 = scmp.eq.s32.totalorder %s27, 0
      %p289 = por %p287, %p288
      %p290 = scmp.le.s32.totalorder 1, %s21
      %p291 = scmp.lt.s32.totalorder %s21, 3
      %p292 = pnand %p290, %p291
      %p293 = pneg %p292
      // Predicated region
      $region9: #{tpu_custom_call.1} parent=5 // pred_check
        _
      $region10: #{tpu_custom_call.1} parent=5 // pred_check_branch
        %295 = sbr.rel (%p292) target = $region12
      $region11: #{tpu_custom_call.1} parent=5 // pred_region
        %s296 = ssub.s32 %s21, 1
        // Predicated region
        $region13: #{tpu_custom_call.1} parent=11 // pred_check
          %p297 = pneg %p150
        $region14: #{tpu_custom_call.1} parent=11 // pred_check_branch
          %299 = sbr.rel (%p297) target = $region16
        $region15: #{tpu_custom_call.1} parent=11 // pred_region
          %s300 = smul.u32 16, %s32
          %p301 = scmp.lt.s32.totalorder %s300, 15
          %s302 = scalar_select %p301, %s300, 15
          %s303 = smul.addr %s302, 8
          %s304 = scalar_lea.vmem %s3, %s303
          %s305 = smul.u32 16, %s32
        $region16: #{tpu_custom_call.1} parent=11 // pred_fallthru
          _
        // Predicated region
        $region17: #{tpu_custom_call.1} parent=11 // pred_check
          %p306 = pneg %p202
        $region18: #{tpu_custom_call.1} parent=11 // pred_check_branch
          %308 = sbr.rel (%p306) target = $region20
        $region19: #{tpu_custom_call.1} parent=11 // pred_region
          %p309 = scmp.lt.s32.totalorder %s32, 0
          %s310 = scalar_select %p309, %s32, 0
          %s311 = scalar_lea.vmem %s5, %s310
        $region20: #{tpu_custom_call.1} parent=11 // pred_fallthru
          _
        // Predicated region
        $region21: #{tpu_custom_call.1} parent=11 // pred_check
          %p312 = pneg %p228
        $region22: #{tpu_custom_call.1} parent=11 // pred_check_branch
          %314 = sbr.rel (%p312) target = $region24
        $region23: #{tpu_custom_call.1} parent=11 // pred_region
          %p315 = scmp.lt.s32.totalorder %s32, 0
          %s316 = scalar_select %p315, %s32, 0
          %s317 = scalar_lea.vmem %s6, %s316
        $region24: #{tpu_custom_call.1} parent=11 // pred_fallthru
          _
        // Predicated region
        $region25: #{tpu_custom_call.1} parent=11 // pred_check
          %p318 = pneg %p254
        $region26: #{tpu_custom_call.1} parent=11 // pred_check_branch
          %320 = sbr.rel (%p318) target = $region28
        $region27: #{tpu_custom_call.1} parent=11 // pred_region
          %p321 = scmp.lt.s32.totalorder %s32, 0
          %s322 = scalar_select %p321, %s32, 0
          %s323 = scalar_lea.vmem %s7, %s322
        $region28: #{tpu_custom_call.1} parent=11 // pred_fallthru
          _
      $region12: #{tpu_custom_call.1} parent=5 // pred_fallthru
        _
      %p324 = scmp.lt.s32.totalorder %s21, 2
      // Predicated region
      $region29: #{tpu_custom_call.1} parent=5 // pred_check
        %p325 = pneg %p324
      $region30: #{tpu_custom_call.1} parent=5 // pred_check_branch
        %327 = sbr.rel (%p325) target = $region32
      $region31: #{tpu_custom_call.1} parent=5 // pred_region
        // Predicated region
        $region33: #{tpu_custom_call.1} parent=31 // pred_check
          %p328 = pneg %p62
        $region34: #{tpu_custom_call.1} parent=31 // pred_check_branch
          %330 = sbr.rel (%p328) target = $region36
        $region35: #{tpu_custom_call.1} parent=31 // pred_region
          %s331 = sand.u32 %s52, 1
          %s332 = sand.u32 %s52, 1
          %s333 = smul.addr %s332, 16
          %s334 = scalar_lea.vmem [#allocation3], %s333
          %s335 = smul.u32 2, %s28
          %s336 = smul.addr %s335, 2
          %s337 = sadd.s32 %s30, %s336
          %s338 = smul.addr %s337, 8
          %s339 = scalar_lea.vmem %s0, %s338
          // Predicated region
          $region37: #{tpu_custom_call.1} parent=35 // pred_check
            _
          $region38: #{tpu_custom_call.1} parent=35 // pred_check_branch
            %341 = sbr.rel (0) target = $region40
          $region39: #{tpu_custom_call.1} parent=35 // pred_region
            // Predicated region
            $region41: #{tpu_custom_call.1} parent=39 // pred_check
              _
            $region42: #{tpu_custom_call.1} parent=39 // pred_check_branch
              %343 = sbr.rel (0) target = $region44
            $region43: #{tpu_custom_call.1} parent=39 // pred_region
              // Predicated region
              $region56: #{tpu_custom_call.1} parent=43 // pred_check
                _
              $region57: #{tpu_custom_call.1} parent=43 // pred_check_branch
                %360 = sbr.rel (0) target = $region59
              $region58: #{tpu_custom_call.1} parent=43 // pred_region
                loop: start=0, step=1, limit=1
                $region60: #{tpu_custom_call.1} parent=58 // loop_pre_header
                  _
                $region61: #{tpu_custom_call.1} parent=58 // loop_header
                  %s362 = sphi 0, %s366
                  %p363 = scmp.ge.s32.totalorder %s362, 1
                  %s367 = sphi %s339, %s339
                  %s368 = sphi %s334, %s334
                $region62: #{tpu_custom_call.1} parent=58 // loop_header_branch
                  %365 = sbr.rel (%p363) target = $region66
                $region63: #{tpu_custom_call.1} parent=58 // loop_body
                  %v369 = vld [vmem:[%s367] sm:$0xff]
                  %370 = vst [vmem:[%s368] sm:$0xff] %v369
                  %v371 = vld [vmem:[%s367 + $0x10] sm:$0xff]
                  %372 = vst [vmem:[%s368 + $0x8] sm:$0xff] %v371
                $region64: #{tpu_custom_call.1} parent=58 // loop_footer
                  %s366 = sadd.s32 1, %s362
                $region65: #{tpu_custom_call.1} parent=58 // loop_footer_branch
                  %361 = sbr.rel target = $region61
                $region66: #{tpu_custom_call.1} parent=58 // loop_exit
                  _
              $region59: #{tpu_custom_call.1} parent=43 // pred_fallthru
                _
              // Predicated region
              $region67: #{tpu_custom_call.1} parent=43 // pred_check
                _
              $region68: #{tpu_custom_call.1} parent=43 // pred_check_branch
                %374 = sbr.rel target = $region70
              $region69: #{tpu_custom_call.1} parent=43 // pred_region
                _
              $region70: #{tpu_custom_call.1} parent=43 // pred_fallthru
                _
            $region44: #{tpu_custom_call.1} parent=39 // pred_fallthru
              _
            // Predicated region
            $region45: #{tpu_custom_call.1} parent=39 // pred_check
              _
            $region46: #{tpu_custom_call.1} parent=39 // pred_check_branch
              %345 = sbr.rel target = $region48
            $region47: #{tpu_custom_call.1} parent=39 // pred_region
              loop: start=0, step=1, limit=1
              $region49: #{tpu_custom_call.1} parent=47 // loop_pre_header
                _
              $region50: #{tpu_custom_call.1} parent=47 // loop_header
                %s348 = sphi 0, %s352
                %p349 = scmp.ge.s32.totalorder %s348, 1
                %s353 = sphi %s339, %s339
                %s354 = sphi %s334, %s334
              $region51: #{tpu_custom_call.1} parent=47 // loop_header_branch
                %351 = sbr.rel (%p349) target = $region55
              $region52: #{tpu_custom_call.1} parent=47 // loop_body
                %v355 = vld [vmem:[%s353] sm:$0xff]
                %356 = vst [vmem:[%s354] sm:$0xff] %v355
                %v357 = vld [vmem:[%s353 + $0x10] sm:$0xff]
                %358 = vst [vmem:[%s354 + $0x8] sm:$0xff] %v357
              $region53: #{tpu_custom_call.1} parent=47 // loop_footer
                %s352 = sadd.s32 1, %s348
              $region54: #{tpu_custom_call.1} parent=47 // loop_footer_branch
                %347 = sbr.rel target = $region50
              $region55: #{tpu_custom_call.1} parent=47 // loop_exit
                _
            $region48: #{tpu_custom_call.1} parent=39 // pred_fallthru
              _
          $region40: #{tpu_custom_call.1} parent=35 // pred_fallthru
            _
          %375 = vnop
        $region36: #{tpu_custom_call.1} parent=31 // pred_fallthru
          _
        // Predicated region
        $region71: #{tpu_custom_call.1} parent=31 // pred_check
          %p376 = pneg %p90
        $region72: #{tpu_custom_call.1} parent=31 // pred_check_branch
          %378 = sbr.rel (%p376) target = $region74
        $region73: #{tpu_custom_call.1} parent=31 // pred_region
          %s379 = sand.u32 %s80, 1
          %s380 = scalar_lea.sflag [#allocation5], %s379
          %s381 = sand.u32 %s80, 1
          %s382 = smul.addr %s381, 128
          %s383 = scalar_lea.vmem [#allocation4], %s382
          %s384 = smul.u32 16, %s29
          %s386 = ssub.s32 2048, 2048
          %387 = vsyncadd %s380, %s386
          %s388 = smul.addr %s384, 2
          %s389 = sadd.s32 %s30, %s388
          %s390 = smul.addr %s389, 128
          %s391 = scalar_lea.hbm %s1, %s390
          %s392 = sshll.u32 %s383, 4
          %s393 = int_to_ptr.vmem [resolvable:$true] %s392
          %398 = dma.hbm_to_vmem [thread:$0]  %s391, 2048, %s393, %s380, 256, 128, 8
        $region74: #{tpu_custom_call.1} parent=31 // pred_fallthru
          _
        // Predicated region
        $region75: #{tpu_custom_call.1} parent=31 // pred_check
          %p399 = pneg %p118
        $region76: #{tpu_custom_call.1} parent=31 // pred_check_branch
          %401 = sbr.rel (%p399) target = $region78
        $region77: #{tpu_custom_call.1} parent=31 // pred_region
          %s402 = sand.u32 %s108, 1
          %s403 = scalar_lea.sflag [#allocation8], %s402
          %s404 = sand.u32 %s108, 1
          %s405 = smul.addr %s404, 128
          %s406 = scalar_lea.vmem [#allocation7], %s405
          %s407 = smul.u32 16, %s29
          %s409 = ssub.s32 2048, 2048
          %410 = vsyncadd %s403, %s409
          %s411 = smul.addr %s407, 2
          %s412 = sadd.s32 %s30, %s411
          %s413 = smul.addr %s412, 128
          %s414 = scalar_lea.hbm %s2, %s413
          %s415 = sshll.u32 %s406, 4
          %s416 = int_to_ptr.vmem [resolvable:$true] %s415
          %421 = dma.hbm_to_vmem [thread:$0]  %s414, 2048, %s416, %s403, 256, 128, 8
        $region78: #{tpu_custom_call.1} parent=31 // pred_fallthru
          _
        // Predicated region
        $region79: #{tpu_custom_call.1} parent=31 // pred_check
          %p422 = pneg %p170
        $region80: #{tpu_custom_call.1} parent=31 // pred_check_branch
          %424 = sbr.rel (%p422) target = $region82
        $region81: #{tpu_custom_call.1} parent=31 // pred_region
          %p425 = scmp.lt.s32.totalorder %s30, 1
          %s426 = scalar_select %p425, %s30, 1
          %s427 = scalar_lea.vmem %s4, %s426
        $region82: #{tpu_custom_call.1} parent=31 // pred_fallthru
          _
      $region32: #{tpu_custom_call.1} parent=5 // pred_fallthru
        _
      %p428 = scmp.le.s32.totalorder 1, %s21
      %p429 = scmp.lt.s32.totalorder %s21, 3
      %p430 = pnand %p428, %p429
      %p431 = pneg %p430
      // Predicated region
      $region83: #{tpu_custom_call.1} parent=5 // pred_check
        _
      $region84: #{tpu_custom_call.1} parent=5 // pred_check_branch
        %433 = sbr.rel (%p430) target = $region86
      $region85: #{tpu_custom_call.1} parent=5 // pred_region
        %s434 = ssub.s32 %s21, 1
        %s435 = sand.u32 %s55, 1
        %s436 = sand.u32 %s55, 1
        %s437 = smul.addr %s436, 16
        %s438 = scalar_lea.vmem [#allocation3], %s437
        // Predicated region
        $region87: #{tpu_custom_call.1} parent=85 // pred_check
          %p439 = pneg %p68
        $region88: #{tpu_custom_call.1} parent=85 // pred_check_branch
          %441 = sbr.rel (%p439) target = $region90
        $region89: #{tpu_custom_call.1} parent=85 // pred_region
          _
        $region90: #{tpu_custom_call.1} parent=85 // pred_fallthru
          _
        %s442 = sand.u32 %s83, 1
        %s443 = scalar_lea.sflag [#allocation5], %s442
        %s444 = sand.u32 %s83, 1
        %s445 = smul.addr %s444, 128
        %s446 = scalar_lea.vmem [#allocation4], %s445
        // Predicated region
        $region91: #{tpu_custom_call.1} parent=85 // pred_check
          %p447 = pneg %p96
        $region92: #{tpu_custom_call.1} parent=85 // pred_check_branch
          %449 = sbr.rel (%p447) target = $region94
        $region93: #{tpu_custom_call.1} parent=85 // pred_region
          %450 = dma.done %s443, 2048
        $region94: #{tpu_custom_call.1} parent=85 // pred_fallthru
          _
        %s451 = sand.u32 %s111, 1
        %s452 = scalar_lea.sflag [#allocation8], %s451
        %s453 = sand.u32 %s111, 1
        %s454 = smul.addr %s453, 128
        %s455 = scalar_lea.vmem [#allocation7], %s454
        // Predicated region
        $region95: #{tpu_custom_call.1} parent=85 // pred_check
          %p456 = pneg %p124
        $region96: #{tpu_custom_call.1} parent=85 // pred_check_branch
          %458 = sbr.rel (%p456) target = $region98
        $region97: #{tpu_custom_call.1} parent=85 // pred_region
          %459 = dma.done %s452, 2048
        $region98: #{tpu_custom_call.1} parent=85 // pred_fallthru
          _
        %s460 = sand.u32 %s55, 1
        %s461 = sand.u32 %s55, 1
        %s462 = smul.addr %s461, 16
        %s463 = scalar_lea.vmem [#allocation3], %s462
        %p464 = pneg %p68
        %p465 = pneg %p65
        %s466 = sand.u32 %s83, 1
        %s467 = scalar_lea.sflag [#allocation5], %s466
        %s468 = sand.u32 %s83, 1
        %s469 = smul.addr %s468, 128
        %s470 = scalar_lea.vmem [#allocation4], %s469
        %p471 = pneg %p96
        %p472 = pneg %p93
        %s473 = sand.u32 %s111, 1
        %s474 = scalar_lea.sflag [#allocation8], %s473
        %s475 = sand.u32 %s111, 1
        %s476 = smul.addr %s475, 128
        %s477 = scalar_lea.vmem [#allocation7], %s476
        %p478 = pneg %p124
        %p479 = pneg %p121
        %s480 = smul.u32 16, %s32
        %p481 = scmp.lt.s32.totalorder %s480, 15
        %s482 = scalar_select %p481, %s480, 15
        %s483 = smul.addr %s482, 8
        %s484 = scalar_lea.vmem %s3, %s483
        %p485 = pneg %p150
        %p486 = pneg %p147
        %p487 = scmp.lt.s32.totalorder %s33, 1
        %s488 = scalar_select %p487, %s33, 1
        %s489 = scalar_lea.vmem %s4, %s488
        %p490 = pneg %p176
        %p491 = pneg %p173
        %p492 = scmp.lt.s32.totalorder %s32, 0
        %s493 = scalar_select %p492, %s32, 0
        %s494 = scalar_lea.vmem %s5, %s493
        %p495 = pneg %p202
        %p496 = pneg %p199
        %p497 = scmp.lt.s32.totalorder %s32, 0
        %s498 = scalar_select %p497, %s32, 0
        %s499 = scalar_lea.vmem %s6, %s498
        %p500 = pneg %p228
        %p501 = pneg %p225
        %p502 = scmp.lt.s32.totalorder %s32, 0
        %s503 = scalar_select %p502, %s32, 0
        %s504 = scalar_lea.vmem %s7, %s503
        %p505 = pneg %p254
        %p506 = pneg %p251
        %p507 = pneg %p282
        %p508 = pneg %p279
        %s509 = smul.u32 2, %s31
        %s510 = smul.u32 16, %s32
        %s511 = smul.u32 16, %s32
        %s512 = smul.u32 16, %s32
        %p513 = scmp.lt.s32.totalorder %s512, 15
        %s514 = scalar_select %p513, %s512, 15
        %s515 = smul.addr %s514, 8
        %s516 = scalar_lea.vmem %s3, %s515
        %s517 = smul.u32 16, %s32
        %p518 = scmp.lt.s32.totalorder %s33, 1
        %s519 = scalar_select %p518, %s33, 1
        %s520 = scalar_lea.vmem %s4, %s519
        %p521 = scmp.lt.s32.totalorder %s32, 0
        %s522 = scalar_select %p521, %s32, 0
        %s523 = scalar_lea.vmem %s5, %s522
        %p524 = scmp.lt.s32.totalorder %s32, 0
        %s525 = scalar_select %p524, %s32, 0
        %s526 = scalar_lea.vmem %s6, %s525
        %p527 = scmp.lt.s32.totalorder %s32, 0
        %s528 = scalar_select %p527, %s32, 0
        %s529 = scalar_lea.vmem %s7, %s528
        %s530 = smul.u32 2, %s31
        %p531 = scmp.eq.s32.totalorder %s33, 0
        // Predicated region
        $region99: #{tpu_custom_call.1} parent=85 // pred_check
          %p532 = pneg %p531
        $region100: #{tpu_custom_call.1} parent=85 // pred_check_branch
          %534 = sbr.rel (%p532) target = $region102
        $region101: #{tpu_custom_call.1} parent=85 // pred_region
          %535 = vst [vmem:[#allocation2] sm:$0xff] 0.0
          %536 = vst [vmem:[#allocation2 + $0x8] sm:$0xff] 0.0
        $region102: #{tpu_custom_call.1} parent=85 // pred_fallthru
          _
        %v537 = vld [vmem:[%s446] sm:$0xff]
        %v538 = vld [vmem:[%s446 + $0x8] sm:$0xff]
        %v539 = vld [vmem:[%s446 + $0x10] sm:$0xff]
        %v540 = vld [vmem:[%s446 + $0x18] sm:$0xff]
        %v541 = vld [vmem:[%s446 + $0x20] sm:$0xff]
        %v542 = vld [vmem:[%s446 + $0x28] sm:$0xff]
        %v543 = vld [vmem:[%s446 + $0x30] sm:$0xff]
        %v544 = vld [vmem:[%s446 + $0x38] sm:$0xff]
        %v545 = vld [vmem:[%s446 + $0x40] sm:$0xff]
        %v546 = vld [vmem:[%s446 + $0x48] sm:$0xff]
        %v547 = vld [vmem:[%s446 + $0x50] sm:$0xff]
        %v548 = vld [vmem:[%s446 + $0x58] sm:$0xff]
        %v549 = vld [vmem:[%s446 + $0x60] sm:$0xff]
        %v550 = vld [vmem:[%s446 + $0x68] sm:$0xff]
        %v551 = vld [vmem:[%s446 + $0x70] sm:$0xff]
        %v552 = vld [vmem:[%s446 + $0x78] sm:$0xff]
        %v553 = vld [vmem:[%s455] sm:$0xff]
        %v554 = vld [vmem:[%s455 + $0x8] sm:$0xff]
        %v555 = vld [vmem:[%s455 + $0x10] sm:$0xff]
        %v556 = vld [vmem:[%s455 + $0x18] sm:$0xff]
        %v557 = vld [vmem:[%s455 + $0x20] sm:$0xff]
        %v558 = vld [vmem:[%s455 + $0x28] sm:$0xff]
        %v559 = vld [vmem:[%s455 + $0x30] sm:$0xff]
        %v560 = vld [vmem:[%s455 + $0x38] sm:$0xff]
        %v561 = vld [vmem:[%s455 + $0x40] sm:$0xff]
        %v562 = vld [vmem:[%s455 + $0x48] sm:$0xff]
        %v563 = vld [vmem:[%s455 + $0x50] sm:$0xff]
        %v564 = vld [vmem:[%s455 + $0x58] sm:$0xff]
        %v565 = vld [vmem:[%s455 + $0x60] sm:$0xff]
        %v566 = vld [vmem:[%s455 + $0x68] sm:$0xff]
        %v567 = vld [vmem:[%s455 + $0x70] sm:$0xff]
        %v568 = vld [vmem:[%s455 + $0x78] sm:$0xff]
        %v569 = vld [vmem:[%s516] sm:$0xff]
        %v570 = vld [vmem:[%s516 + $0x8] sm:$0xff]
        %v571 = vld [vmem:[%s516 + $0x10] sm:$0xff]
        %v572 = vld [vmem:[%s516 + $0x18] sm:$0xff]
        %v573 = vld [vmem:[%s516 + $0x20] sm:$0xff]
        %v574 = vld [vmem:[%s516 + $0x28] sm:$0xff]
        %v575 = vld [vmem:[%s516 + $0x30] sm:$0xff]
        %v576 = vld [vmem:[%s516 + $0x38] sm:$0xff]
        %v577 = vld [vmem:[%s516 + $0x40] sm:$0xff]
        %v578 = vld [vmem:[%s516 + $0x48] sm:$0xff]
        %v579 = vld [vmem:[%s516 + $0x50] sm:$0xff]
        %v580 = vld [vmem:[%s516 + $0x58] sm:$0xff]
        %v581 = vld [vmem:[%s516 + $0x60] sm:$0xff]
        %v582 = vld [vmem:[%s516 + $0x68] sm:$0xff]
        %v583 = vld [vmem:[%s516 + $0x70] sm:$0xff]
        %v584 = vld [vmem:[%s516 + $0x78] sm:$0xff]
        %v585 = vld [vmem:[%s520] sm:$0x1]
        %587 = vset.pattern.permute.xlu0 0
        %588 = vperm.xlu0 %587, %v569
        %v589 = vpop.permute.xlu0 %588
        %592 = vset.pattern.permute.xlu0 0
        %593 = vperm.xlu0 %592, %v570
        %v594 = vpop.permute.xlu0 %593
        %597 = vset.pattern.permute.xlu0 0
        %598 = vperm.xlu0 %597, %v571
        %v599 = vpop.permute.xlu0 %598
        %602 = vset.pattern.permute.xlu0 0
        %603 = vperm.xlu0 %602, %v572
        %v604 = vpop.permute.xlu0 %603
        %607 = vset.pattern.permute.xlu0 0
        %608 = vperm.xlu0 %607, %v573
        %v609 = vpop.permute.xlu0 %608
        %612 = vset.pattern.permute.xlu0 0
        %613 = vperm.xlu0 %612, %v574
        %v614 = vpop.permute.xlu0 %613
        %617 = vset.pattern.permute.xlu0 0
        %618 = vperm.xlu0 %617, %v575
        %v619 = vpop.permute.xlu0 %618
        %622 = vset.pattern.permute.xlu0 0
        %623 = vperm.xlu0 %622, %v576
        %v624 = vpop.permute.xlu0 %623
        %627 = vset.pattern.permute.xlu0 0
        %628 = vperm.xlu0 %627, %v577
        %v629 = vpop.permute.xlu0 %628
        %632 = vset.pattern.permute.xlu0 0
        %633 = vperm.xlu0 %632, %v578
        %v634 = vpop.permute.xlu0 %633
        %637 = vset.pattern.permute.xlu0 0
        %638 = vperm.xlu0 %637, %v579
        %v639 = vpop.permute.xlu0 %638
        %642 = vset.pattern.permute.xlu0 0
        %643 = vperm.xlu0 %642, %v580
        %v644 = vpop.permute.xlu0 %643
        %647 = vset.pattern.permute.xlu0 0
        %648 = vperm.xlu0 %647, %v581
        %v649 = vpop.permute.xlu0 %648
        %652 = vset.pattern.permute.xlu0 0
        %653 = vperm.xlu0 %652, %v582
        %v654 = vpop.permute.xlu0 %653
        %657 = vset.pattern.permute.xlu0 0
        %658 = vperm.xlu0 %657, %v583
        %v659 = vpop.permute.xlu0 %658
        %662 = vset.pattern.permute.xlu0 0
        %663 = vperm.xlu0 %662, %v584
        %v664 = vpop.permute.xlu0 %663
        %v667 = vlaneseq
        %v668 = vshrl.u32 %v667, 7
        %v669 = vsub.s32 0, %v668
        %v670 = vrot.slane %v585, %v669
        %v672 = vmul.f32 %v589, %v670
        %v673 = vmul.f32 %v594, %v670
        %v674 = vmul.f32 %v599, %v670
        %v675 = vmul.f32 %v604, %v670
        %v676 = vmul.f32 %v609, %v670
        %v677 = vmul.f32 %v614, %v670
        %v678 = vmul.f32 %v619, %v670
        %v679 = vmul.f32 %v624, %v670
        %v680 = vmul.f32 %v629, %v670
        %v681 = vmul.f32 %v634, %v670
        %v682 = vmul.f32 %v639, %v670
        %v683 = vmul.f32 %v644, %v670
        %v684 = vmul.f32 %v649, %v670
        %v685 = vmul.f32 %v654, %v670
        %v686 = vmul.f32 %v659, %v670
        %v687 = vmul.f32 %v664, %v670
        %v688 = vmul.f32 %v553, %v672
        %v689 = vmul.f32 %v554, %v673
        %v690 = vmul.f32 %v555, %v674
        %v691 = vmul.f32 %v556, %v675
        %v692 = vmul.f32 %v557, %v676
        %v693 = vmul.f32 %v558, %v677
        %v694 = vmul.f32 %v559, %v678
        %v695 = vmul.f32 %v560, %v679
        %v696 = vmul.f32 %v561, %v680
        %v697 = vmul.f32 %v562, %v681
        %v698 = vmul.f32 %v563, %v682
        %v699 = vmul.f32 %v564, %v683
        %v700 = vmul.f32 %v565, %v684
        %v701 = vmul.f32 %v566, %v685
        %v702 = vmul.f32 %v567, %v686
        %v703 = vmul.f32 %v568, %v687
        %v704 = vadd.f32 %v537, %v688
        %v705 = vadd.f32 %v538, %v689
        %v706 = vadd.f32 %v539, %v690
        %v707 = vadd.f32 %v540, %v691
        %v708 = vadd.f32 %v541, %v692
        %v709 = vadd.f32 %v542, %v693
        %v710 = vadd.f32 %v543, %v694
        %v711 = vadd.f32 %v544, %v695
        %v712 = vadd.f32 %v545, %v696
        %v713 = vadd.f32 %v546, %v697
        %v714 = vadd.f32 %v547, %v698
        %v715 = vadd.f32 %v548, %v699
        %v716 = vadd.f32 %v549, %v700
        %v717 = vadd.f32 %v550, %v701
        %v718 = vadd.f32 %v551, %v702
        %v719 = vadd.f32 %v552, %v703
        %v720 = vld [vmem:[#allocation2] sm:$0xff]
        %v721 = vld [vmem:[#allocation2 + $0x8] sm:$0xff]
        %v722 = vld [vmem:[%s438] sm:$0xff]
        %v723 = vld [vmem:[%s438 + $0x8] sm:$0xff]
        %724 = vmatprep.subr.mxu0 0.0
        %725 = vmatpush1.xpose.msra.mxu0 %v704
        %726 = vmatprep.subr.mxu0 0.0
        %727 = vmatpush1.xpose.msra.mxu0 %v705
        %728 = vmatprep.subr.mxu0 0.0
        %729 = vmatpush1.xpose.msra.mxu0 %v706
        %730 = vmatprep.subr.mxu0 0.0
        %731 = vmatpush1.xpose.msra.mxu0 %v707
        %732 = vmatprep.subr.mxu0 0.0
        %733 = vmatpush1.xpose.msra.mxu0 %v708
        %734 = vmatprep.subr.mxu0 0.0
        %735 = vmatpush1.xpose.msra.mxu0 %v709
        %736 = vmatprep.subr.mxu0 0.0
        %737 = vmatpush1.xpose.msra.mxu0 %v710
        %738 = vmatprep.subr.mxu0 0.0
        %739 = vmatpush1.xpose.msra.mxu0 %v711
        %740 = vmatprep.subr.mxu0 0.0
        %741 = vmatpush1.xpose.msra.mxu0 %v712
        %742 = vmatprep.subr.mxu0 0.0
        %743 = vmatpush1.xpose.msra.mxu0 %v713
        %744 = vmatprep.subr.mxu0 0.0
        %745 = vmatpush1.xpose.msra.mxu0 %v714
        %746 = vmatprep.subr.mxu0 0.0
        %747 = vmatpush1.xpose.msra.mxu0 %v715
        %748 = vmatprep.subr.mxu0 0.0
        %749 = vmatpush1.xpose.msra.mxu0 %v716
        %750 = vmatprep.subr.mxu0 0.0
        %751 = vmatpush1.xpose.msra.mxu0 %v717
        %752 = vmatprep.subr.mxu0 0.0
        %753 = vmatpush1.xpose.msra.mxu0 %v718
        %754 = vmatprep.subr.mxu0 0.0
        %755 = vmatpush1.xpose.msra.mxu0 %v719
        %756 = vmatprep.subr.mxu0 0.0
        %757 = vmatpush1.xpose.msra.mxu0 0.0
        %758 = vmatprep.subr.mxu0 0.0
        %759 = vmatpush1.xpose.msra.mxu0 0.0
        %760 = vmatprep.subr.mxu0 0.0
        %761 = vmatpush1.xpose.msra.mxu0 0.0
        %762 = vmatprep.subr.mxu0 0.0
        %763 = vmatpush1.xpose.msra.mxu0 0.0
        %764 = vmatprep.subr.mxu0 0.0
        %765 = vmatpush1.xpose.msra.mxu0 0.0
        %766 = vmatprep.subr.mxu0 0.0
        %767 = vmatpush1.xpose.msra.mxu0 0.0
        %768 = vmatprep.subr.mxu0 0.0
        %769 = vmatpush1.xpose.msra.mxu0 0.0
        %770 = vmatprep.subr.mxu0 0.0
        %771 = vmatpush1.xpose.msra.mxu0 0.0
        %772 = vmatprep.subr.mxu0 0.0
        %773 = vmatpush1.xpose.msra.mxu0 0.0
        %774 = vmatprep.subr.mxu0 0.0
        %775 = vmatpush1.xpose.msra.mxu0 0.0
        %776 = vmatprep.subr.mxu0 0.0
        %777 = vmatpush1.xpose.msra.mxu0 0.0
        %778 = vmatprep.subr.mxu0 0.0
        %779 = vmatpush1.xpose.msra.mxu0 0.0
        %780 = vmatprep.subr.mxu0 0.0
        %781 = vmatpush1.xpose.msra.mxu0 0.0
        %782 = vmatprep.subr.mxu0 0.0
        %783 = vmatpush1.xpose.msra.mxu0 0.0
        %784 = vmatprep.subr.mxu0 0.0
        %785 = vmatpush1.xpose.msra.mxu0 0.0
        %786 = vmatprep.subr.mxu0 0.0
        %787 = vmatpush1.xpose.msra.mxu0 0.0
        %788 = vmatprep.mubr.f32.mxu0 0.0
        %789 = vmatmul.mubr.f32.gmra.mrb[0].mxu0 %v722
        %v790 = vpop.f32.mrb[0].mxu0
        %v791 = vadd.f32 0.0, %v790
        %v792 = vpop.f32.mrb[0].mxu0
        %793 = vmatprep.mubr.f32.mxu0 0.0
        %794 = vmatmul.mubr.f32.gmra.mrb[0].mxu0 %v723
        %v795 = vpop.f32.mrb[0].mxu0
        %v796 = vadd.f32 0.0, %v795
        %v797 = vpop.f32.mrb[0].mxu0
        %798 = vdwg.mxu0
        %v799 = vadd.f32 %v720, %v791
        %v800 = vadd.f32 %v721, %v796
        %801 = vst [vmem:[#allocation2] sm:$0xff] %v799
        %802 = vst [vmem:[#allocation2 + $0x8] sm:$0xff] %v800
        %p803 = scmp.eq.s32.totalorder %s33, 1
        // Predicated region
        $region103: #{tpu_custom_call.1} parent=85 // pred_check
          %p804 = pneg %p803
        $region104: #{tpu_custom_call.1} parent=85 // pred_check_branch
          %806 = sbr.rel (%p804) target = $region106
        $region105: #{tpu_custom_call.1} parent=85 // pred_region
          %v807 = vld [vmem:[%s523] sm:$0x1]
          %v808 = vld [vmem:[%s526] sm:$0x1]
          %v809 = vld [vmem:[%s529] sm:$0x1]
          %v810 = vmul.f32 %v808, %v809
          %v811 = vadd.f32 %v807, %v810
          %v812 = vld [vmem:[#allocation2] sm:$0xff]
          %v813 = vld [vmem:[#allocation2 + $0x8] sm:$0xff]
          %v815 = vlaneseq
          %v816 = vshrl.u32 %v815, 7
          %v817 = vsub.s32 0, %v816
          %v818 = vrot.slane %v811, %v817
          %v820 = vadd.f32 %v812, %v818
          %v821 = vadd.f32 %v813, %v818
          %822 = vst [vmem:[#allocation9] sm:$0xff] %v820
          %823 = vst [vmem:[#allocation9 + $0x8] sm:$0xff] %v821
        $region106: #{tpu_custom_call.1} parent=85 // pred_fallthru
          _
        // Predicated region
        $region107: #{tpu_custom_call.1} parent=85 // pred_check
          %p824 = pneg %p279
        $region108: #{tpu_custom_call.1} parent=85 // pred_check_branch
          %826 = sbr.rel (%p824) target = $region110
        $region109: #{tpu_custom_call.1} parent=85 // pred_region
          %s827 = smul.u32 2, %s31
          %s829 = ssub.s32 256, 256
          %830 = vsyncadd [#allocation6], %s829
          %s831 = sadd.s32 %s32, %s827
          %s832 = smul.addr %s831, 128
          %s833 = scalar_lea.hbm %s8, %s832
          %s834 = sshll.u32 [#allocation9], 4
          %s835 = int_to_ptr.vmem [resolvable:$true] %s834
          %840 = dma.vmem_to_hbm [thread:$0]  %s835, 256, %s833, [#allocation6], 128, 128, 8
        $region110: #{tpu_custom_call.1} parent=85 // pred_fallthru
          _
        // Predicated region
        $region111: #{tpu_custom_call.1} parent=85 // pred_check
          %p841 = pneg %p279
        $region112: #{tpu_custom_call.1} parent=85 // pred_check_branch
          %843 = sbr.rel (%p841) target = $region114
        $region113: #{tpu_custom_call.1} parent=85 // pred_region
          %844 = dma.done [#allocation6], 256
        $region114: #{tpu_custom_call.1} parent=85 // pred_fallthru
          _
      $region86: #{tpu_custom_call.1} parent=5 // pred_fallthru
        _
      %p845 = scmp.le.s32.totalorder 2, %s21
      // Predicated region
      $region115: #{tpu_custom_call.1} parent=5 // pred_check
        %p846 = pneg %p845
      $region116: #{tpu_custom_call.1} parent=5 // pred_check_branch
        %848 = sbr.rel (%p846) target = $region118
      $region117: #{tpu_custom_call.1} parent=5 // pred_region
        %s849 = ssub.s32 %s21, 2
      $region118: #{tpu_custom_call.1} parent=5 // pred_fallthru
        _
    $region6: #{tpu_custom_call.1} parent=1 // loop_footer
      %s25 = sadd.s32 1, %s21
    $region7: #{tpu_custom_call.1} parent=1 // loop_footer_branch
      %20 = sbr.rel target = $region3
    $region8: #{tpu_custom_call.1} parent=1 // loop_exit
      _
    %850 = vsyncpa [#allocation5], 1
    %s851 = scalar_lea.sflag [#allocation5], 1
    %852 = vsyncpa %s851, 1
    %853 = vsyncpa [#allocation8], 1
    %s854 = scalar_lea.sflag [#allocation8], 1
    %855 = vsyncpa %s854, 1
    %856 = vsyncpa [#allocation6], 1
    %s857 = scalar_lea.sflag [#allocation6], 1
    %858 = vsyncpa %s857, 1

</llo_original>
